<compile_context>
chip_gen: v5e
topology: v5e:2x2
jax: 0.10.0
libtpu: 0.0.40
codegen_flags: <defaults>
</compile_context>

<pallas_src>
import jax
import jax.numpy as jnp
from jax.experimental import pallas as pl
from jax.experimental.pallas import tpu as pltpu

EPS = 1e-5


def _disc_kernel(x_ref, w1_ref, w2_ref, bn_ref, w3_ref, b3_ref, out_ref):
    """Grid axis 0 tiles the (padded) num_domains output columns of the final Linear.

    x/W1/W2/W3 refs hold bf16 operands; all accumulation is f32 on the MXU.
    bn_ref is an (8, H) f32 block: rows 0..5 = b1, gamma1, beta1, b2, gamma2, beta2.
    BatchNorm needs the whole batch resident in one block (B is never tiled).
    """
    bn = bn_ref[...]

    # ---- layer 1: Linear + BatchNorm1d (batch stats) + ReLU ----
    h = jnp.dot(x_ref[...], w1_ref[...],
                preferred_element_type=jnp.float32) + bn[0:1, :]
    # TODO(synk): for large B, compute the column sums via a [1,B] ones-vector matmul
    # (MXU) instead of a cross-sublane mean on the VPU/XLU.
    mu = jnp.mean(h, axis=0, keepdims=True)
    hc = h - mu
    var = jnp.mean(hc * hc, axis=0, keepdims=True)          # biased variance
    h = hc * jax.lax.rsqrt(var + EPS) * bn[1:2, :] + bn[2:3, :]
    h = jnp.maximum(h, 0.0).astype(jnp.bfloat16)

    # ---- layer 2: Linear + BatchNorm1d (batch stats) + ReLU ----
    h = jnp.dot(h, w2_ref[...], preferred_element_type=jnp.float32) + bn[3:4, :]
    mu = jnp.mean(h, axis=0, keepdims=True)
    hc = h - mu
    var = jnp.mean(hc * hc, axis=0, keepdims=True)
    h = hc * jax.lax.rsqrt(var + EPS) * bn[4:5, :] + bn[5:6, :]
    h = jnp.maximum(h, 0.0).astype(jnp.bfloat16)

    # ---- final Linear, tiled over output columns ----
    out_ref[...] = (jnp.dot(h, w3_ref[...], preferred_element_type=jnp.float32)
                    + b3_ref[...]).astype(out_ref.dtype)


def _round_up(x, m):
    return (x + m - 1) // m * m


def _chip_config():
    """(vmem_budget_bytes, min_column_tiles) per TPU generation."""
    try:
        kind = jax.devices()[0].device_kind.lower()
    except Exception:  # pragma: no cover - defensive only
        kind = ""
    is_v7 = ("v7" in kind) or ("tpu7" in kind)
    if is_v7:
        # 64 MiB physical VMEM per TensorCore: budget 48 MiB, and prefer >=2 column
        # tiles so the dominant W3 work shards across both TensorCores (megacore).
        return 48 * 1024 * 1024, 2
    # v5e / v6e: 128 MiB physical, single TensorCore -> fewest grid steps is best.
    return 64 * 1024 * 1024, 1


def discriminator_forward(x, params, *, tn_max=2048):
    """x: [B, input_dim] float32.  Returns logits [B, num_domains] (training-mode BN)."""
    w1, b1, g1, be1, w2, b2, g2, be2, w3, b3 = params
    B, Din = x.shape
    H = w1.shape[1]
    N = w3.shape[1]
    out_dtype = x.dtype

    vmem_budget, min_tiles = _chip_config()

    # Matmul operands in bf16 (f32 accumulation happens on the MXU inside the kernel).
    x_bf = x.astype(jnp.bfloat16)
    w1_bf = w1.astype(jnp.bfloat16)
    w2_bf = w2.astype(jnp.bfloat16)
    w3_bf = w3.astype(jnp.bfloat16)

    # Pack the six per-feature vectors into one sublane-aligned (8, H) f32 block.
    bn_pack = jnp.zeros((8, H), jnp.float32)
    bn_pack = bn_pack.at[0].set(b1).at[1].set(g1).at[2].set(be1)
    bn_pack = bn_pack.at[3].set(b2).at[4].set(g2).at[5].set(be2)

    # ---- VMEM-budget-driven output-column tile size ----
    resident = (B * Din + Din * H + H * H) * 2 + 8 * H * 4       # single-buffered inputs
    per_col = 2 * (H * 2 + 8 * 4 + B * 4)   # double-buffered: W3(bf16) + b3(f32, 8 rows) + out(f32)
    avail = max(vmem_budget - resident - (2 << 20), per_col * 128)
    tn_fit = max(128, (avail // per_col) // 128 * 128)

    N128 = _round_up(N, 128)
    tn_cap = max(128, min(tn_max, tn_fit))
    num_tiles = pl.cdiv(N128, tn_cap)
    if N128 >= 256:
        num_tiles = max(num_tiles, min_tiles)        # v7x: use both TensorCores
    tn = _round_up(pl.cdiv(N128, num_tiles), 128)    # padding bounded to <128*num_tiles lanes
    n_pad = num_tiles * tn

    if n_pad != N:
        w3_bf = jnp.pad(w3_bf, ((0, 0), (0, n_pad - N)))
        b3 = jnp.pad(b3, ((0, n_pad - N),))
    b3r = b3.reshape(1, n_pad).astype(jnp.float32)

    def build(invariant_mode):
        inv = lambda shape: pl.BlockSpec(shape, lambda j: (0, 0),
                                         pipeline_mode=invariant_mode)
        return pl.pallas_call(
            _disc_kernel,
            out_shape=jax.ShapeDtypeStruct((B, n_pad), out_dtype),
            grid_spec=pltpu.PrefetchScalarGridSpec(
                num_scalar_prefetch=0,
                grid=(num_tiles,),
                in_specs=[
                    inv((B, Din)),                               # x          (bf16)
                    inv((Din, H)),                               # W1         (bf16)
                    inv((H, H)),                                 # W2         (bf16)
                    inv((8, H)),                                 # packed BN  (f32)
                    pl.BlockSpec((H, tn), lambda j: (0, j)),     # W3 column tile (bf16)
                    pl.BlockSpec((1, tn), lambda j: (0, j)),     # b3 column tile (f32)
                ],
                out_specs=pl.BlockSpec((B, tn), lambda j: (0, j)),
            ),
            compiler_params=pltpu.CompilerParams(
                dimension_semantics=("parallel",),   # no cross-tile state -> megacore OK
                vmem_limit_bytes=vmem_budget),
        )

    args = (x_bf, w1_bf, w2_bf, bn_pack, w3_bf, b3r)
    try:
        # Grid-invariant inputs single-buffered (constant index_map); frees VMEM for tn.
        out_padded = build(pl.Buffered(1))(*args)
    except Exception:
        # Fallback: default double-buffering if this build rejects buffer_count=1.
        out_padded = build(None)(*args)

    # b3 is zero-padded and padded logits are discarded here, so pad+slice is exact.
    return out_padded[:, :N] if n_pad != N else out_padded


def init_params(key, input_dim, hidden_dim, num_domains):
    k1, k2, k3 = jax.random.split(key, 3)
    w1 = jax.random.normal(k1, (input_dim, hidden_dim), jnp.float32) * 0.05
    b1 = jnp.zeros((hidden_dim,), jnp.float32)
    g1 = jnp.ones((hidden_dim,), jnp.float32)
    be1 = jnp.zeros((hidden_dim,), jnp.float32)
    w2 = jax.random.normal(k2, (hidden_dim, hidden_dim), jnp.float32) * 0.05
    b2 = jnp.zeros((hidden_dim,), jnp.float32)
    g2 = jnp.ones((hidden_dim,), jnp.float32)
    be2 = jnp.zeros((hidden_dim,), jnp.float32)
    w3 = jax.random.normal(k3, (hidden_dim, num_domains), jnp.float32) * 0.05
    b3 = jnp.zeros((num_domains,), jnp.float32)
    return (w1, b1, g1, be1, w2, b2, g2, be2, w3, b3)


def reference_forward(x, params):
    """Pure-JAX reference (PyTorch training-mode BN) with the same bf16 operand rounding."""
    w1, b1, g1, be1, w2, b2, g2, be2, w3, b3 = params
    bf = lambda a: a.astype(jnp.bfloat16).astype(jnp.float32)

    def bn(h, g, be):
        mu = jnp.mean(h, axis=0, keepdims=True)
        var = jnp.mean((h - mu) ** 2, axis=0, keepdims=True)
        return (h - mu) / jnp.sqrt(var + EPS) * g + be

    h = jnp.maximum(bn(bf(x) @ bf(w1) + b1, g1, be1), 0.0)
    h = jnp.maximum(bn(bf(h) @ bf(w2) + b2, g2, be2), 0.0)
    return bf(h) @ bf(w3) + b3


if __name__ == "__main__":
    # Small shapes consistent with the module (input_dim == hidden_dim; num_domains larger).
    # NUM_DOMAINS=300 deliberately exercises the pad-to-128 / slice path.
    B, INPUT_DIM, HIDDEN_DIM, NUM_DOMAINS = 8, 32, 32, 300

    key = jax.random.PRNGKey(0)
    kx, kp = jax.random.split(key)
    x = jax.random.normal(kx, (B, INPUT_DIM), jnp.float32)
    params = init_params(kp, INPUT_DIM, HIDDEN_DIM, NUM_DOMAINS)

    out = discriminator_forward(x, params)
    out = jax.block_until_ready(out)

    ref = reference_forward(x, params)
    assert out.shape == (B, NUM_DOMAINS)
    assert jnp.allclose(out, ref, atol=2e-3, rtol=2e-3), "mismatch vs reference"

    print("KERNEL_OK")
</pallas_src>

<mosaic_0001>
module attributes {stable_mosaic.version = 11 : i64} {
  func.func @_disc_kernel(%arg0: i32, %arg1: memref<8x32xbf16, #tpu.memory_space<vmem>>, %arg2: memref<32x32xbf16, #tpu.memory_space<vmem>>, %arg3: memref<32x32xbf16, #tpu.memory_space<vmem>>, %arg4: memref<8x32xf32, #tpu.memory_space<vmem>>, %arg5: memref<32x384xbf16, #tpu.memory_space<vmem>>, %arg6: memref<1x384xf32, #tpu.memory_space<vmem>>, %arg7: memref<8x384xf32, #tpu.memory_space<vmem>>) attributes {dimension_semantics = [#tpu.dimension_semantics<parallel>], iteration_bounds = array<i64: 1>, scalar_prefetch = 0 : i64, scratch_operands = 0 : i64, tpu.core_type = #tpu.core_type<tc>, window_params = [{pipeline_mode = #tpu.pipeline_mode<synchronous>, transform_indices = @transform_0, window_bounds = array<i64: 8, 32>}, {pipeline_mode = #tpu.pipeline_mode<synchronous>, transform_indices = @transform_1, window_bounds = array<i64: 32, 32>}, {pipeline_mode = #tpu.pipeline_mode<synchronous>, transform_indices = @transform_2, window_bounds = array<i64: 32, 32>}, {pipeline_mode = #tpu.pipeline_mode<synchronous>, transform_indices = @transform_3, window_bounds = array<i64: 8, 32>}, {transform_indices = @transform_4, window_bounds = array<i64: 32, 384>}, {transform_indices = @transform_5, window_bounds = array<i64: 1, 384>}, {transform_indices = @transform_6, window_bounds = array<i64: 8, 384>}]} {
    %c0 = arith.constant 0 : index
    %c0_0 = arith.constant 0 : index
    %0 = vector.load %arg4[%c0, %c0_0] : memref<8x32xf32, #tpu.memory_space<vmem>>, vector<8x32xf32>
    %c0_1 = arith.constant 0 : index
    %c0_2 = arith.constant 0 : index
    %1 = vector.load %arg1[%c0_1, %c0_2] : memref<8x32xbf16, #tpu.memory_space<vmem>>, vector<8x32xbf16>
    %c0_3 = arith.constant 0 : index
    %c0_4 = arith.constant 0 : index
    %2 = vector.load %arg2[%c0_3, %c0_4] : memref<32x32xbf16, #tpu.memory_space<vmem>>, vector<32x32xbf16>
    %cst = arith.constant dense<0.000000e+00> : vector<8x32xf32>
    %3 = tpu.matmul %1, %2, %cst {dimension_numbers = #tpu.dot_dimension_numbers<[1], [0], [0], [1], [0, 0, 1, 1], [], []>} : vector<8x32xbf16>, vector<32x32xbf16>, vector<8x32xf32> -> vector<8x32xf32>
    %4 = vector.extract_strided_slice %0 {offsets = [0, 0], sizes = [1, 32], strides = [1, 1]} : vector<8x32xf32> to vector<1x32xf32>
    %5 = vector.broadcast %4 : vector<1x32xf32> to vector<8x32xf32>
    %6 = arith.addf %3, %5 : vector<8x32xf32>
    %cst_5 = arith.constant dense<0.000000e+00> : vector<32xf32>
    %7 = vector.multi_reduction <add>, %6, %cst_5 [0] : vector<8x32xf32> to vector<32xf32>
    %8 = vector.shape_cast %7 : vector<32xf32> to vector<1x32xf32>
    %cst_6 = arith.constant 8.000000e+00 : f32
    %9 = vector.broadcast %cst_6 : f32 to vector<1x32xf32>
    %10 = arith.divf %8, %9 : vector<1x32xf32>
    %11 = vector.broadcast %10 : vector<1x32xf32> to vector<8x32xf32>
    %12 = arith.subf %6, %11 : vector<8x32xf32>
    %13 = arith.mulf %12, %12 : vector<8x32xf32>
    %cst_7 = arith.constant dense<0.000000e+00> : vector<32xf32>
    %14 = vector.multi_reduction <add>, %13, %cst_7 [0] : vector<8x32xf32> to vector<32xf32>
    %15 = vector.shape_cast %14 : vector<32xf32> to vector<1x32xf32>
    %cst_8 = arith.constant 8.000000e+00 : f32
    %16 = vector.broadcast %cst_8 : f32 to vector<1x32xf32>
    %17 = arith.divf %15, %16 : vector<1x32xf32>
    %cst_9 = arith.constant 9.99999974E-6 : f32
    %18 = vector.broadcast %cst_9 : f32 to vector<1x32xf32>
    %19 = arith.addf %17, %18 : vector<1x32xf32>
    %20 = math.rsqrt %19 : vector<1x32xf32>
    %21 = vector.broadcast %20 : vector<1x32xf32> to vector<8x32xf32>
    %22 = arith.mulf %12, %21 : vector<8x32xf32>
    %23 = vector.extract_strided_slice %0 {offsets = [1, 0], sizes = [1, 32], strides = [1, 1]} : vector<8x32xf32> to vector<1x32xf32>
    %24 = vector.broadcast %23 : vector<1x32xf32> to vector<8x32xf32>
    %25 = arith.mulf %22, %24 : vector<8x32xf32>
    %26 = vector.extract_strided_slice %0 {offsets = [2, 0], sizes = [1, 32], strides = [1, 1]} : vector<8x32xf32> to vector<1x32xf32>
    %27 = vector.broadcast %26 : vector<1x32xf32> to vector<8x32xf32>
    %28 = arith.addf %25, %27 : vector<8x32xf32>
    %cst_10 = arith.constant 0.000000e+00 : f32
    %29 = vector.broadcast %cst_10 : f32 to vector<8x32xf32>
    %30 = arith.maximumf %28, %29 : vector<8x32xf32>
    %31 = arith.truncf %30 : vector<8x32xf32> to vector<8x32xbf16>
    %c0_11 = arith.constant 0 : index
    %c0_12 = arith.constant 0 : index
    %32 = vector.load %arg3[%c0_11, %c0_12] : memref<32x32xbf16, #tpu.memory_space<vmem>>, vector<32x32xbf16>
    %cst_13 = arith.constant dense<0.000000e+00> : vector<8x32xf32>
    %33 = tpu.matmul %31, %32, %cst_13 {dimension_numbers = #tpu.dot_dimension_numbers<[1], [0], [0], [1], [0, 0, 1, 1], [], []>} : vector<8x32xbf16>, vector<32x32xbf16>, vector<8x32xf32> -> vector<8x32xf32>
    %34 = vector.extract_strided_slice %0 {offsets = [3, 0], sizes = [1, 32], strides = [1, 1]} : vector<8x32xf32> to vector<1x32xf32>
    %35 = vector.broadcast %34 : vector<1x32xf32> to vector<8x32xf32>
    %36 = arith.addf %33, %35 : vector<8x32xf32>
    %cst_14 = arith.constant dense<0.000000e+00> : vector<32xf32>
    %37 = vector.multi_reduction <add>, %36, %cst_14 [0] : vector<8x32xf32> to vector<32xf32>
    %38 = vector.shape_cast %37 : vector<32xf32> to vector<1x32xf32>
    %cst_15 = arith.constant 8.000000e+00 : f32
    %39 = vector.broadcast %cst_15 : f32 to vector<1x32xf32>
    %40 = arith.divf %38, %39 : vector<1x32xf32>
    %41 = vector.broadcast %40 : vector<1x32xf32> to vector<8x32xf32>
    %42 = arith.subf %36, %41 : vector<8x32xf32>
    %43 = arith.mulf %42, %42 : vector<8x32xf32>
    %cst_16 = arith.constant dense<0.000000e+00> : vector<32xf32>
    %44 = vector.multi_reduction <add>, %43, %cst_16 [0] : vector<8x32xf32> to vector<32xf32>
    %45 = vector.shape_cast %44 : vector<32xf32> to vector<1x32xf32>
    %cst_17 = arith.constant 8.000000e+00 : f32
    %46 = vector.broadcast %cst_17 : f32 to vector<1x32xf32>
    %47 = arith.divf %45, %46 : vector<1x32xf32>
    %cst_18 = arith.constant 9.99999974E-6 : f32
    %48 = vector.broadcast %cst_18 : f32 to vector<1x32xf32>
    %49 = arith.addf %47, %48 : vector<1x32xf32>
    %50 = math.rsqrt %49 : vector<1x32xf32>
    %51 = vector.broadcast %50 : vector<1x32xf32> to vector<8x32xf32>
    %52 = arith.mulf %42, %51 : vector<8x32xf32>
    %53 = vector.extract_strided_slice %0 {offsets = [4, 0], sizes = [1, 32], strides = [1, 1]} : vector<8x32xf32> to vector<1x32xf32>
    %54 = vector.broadcast %53 : vector<1x32xf32> to vector<8x32xf32>
    %55 = arith.mulf %52, %54 : vector<8x32xf32>
    %56 = vector.extract_strided_slice %0 {offsets = [5, 0], sizes = [1, 32], strides = [1, 1]} : vector<8x32xf32> to vector<1x32xf32>
    %57 = vector.broadcast %56 : vector<1x32xf32> to vector<8x32xf32>
    %58 = arith.addf %55, %57 : vector<8x32xf32>
    %cst_19 = arith.constant 0.000000e+00 : f32
    %59 = vector.broadcast %cst_19 : f32 to vector<8x32xf32>
    %60 = arith.maximumf %58, %59 : vector<8x32xf32>
    %61 = arith.truncf %60 : vector<8x32xf32> to vector<8x32xbf16>
    %c0_20 = arith.constant 0 : index
    %c0_21 = arith.constant 0 : index
    %62 = vector.load %arg5[%c0_20, %c0_21] : memref<32x384xbf16, #tpu.memory_space<vmem>>, vector<32x384xbf16>
    %cst_22 = arith.constant dense<0.000000e+00> : vector<8x384xf32>
    %63 = tpu.matmul %61, %62, %cst_22 {dimension_numbers = #tpu.dot_dimension_numbers<[1], [0], [0], [1], [0, 0, 1, 1], [], []>} : vector<8x32xbf16>, vector<32x384xbf16>, vector<8x384xf32> -> vector<8x384xf32>
    %c0_23 = arith.constant 0 : index
    %c0_24 = arith.constant 0 : index
    %64 = vector.load %arg6[%c0_23, %c0_24] : memref<1x384xf32, #tpu.memory_space<vmem>>, vector<1x384xf32>
    %65 = vector.broadcast %64 : vector<1x384xf32> to vector<8x384xf32>
    %66 = arith.addf %63, %65 : vector<8x384xf32>
    %c0_25 = arith.constant 0 : index
    %c0_26 = arith.constant 0 : index
    %67 = vector.load %arg7[%c0_25, %c0_26] : memref<8x384xf32, #tpu.memory_space<vmem>>, vector<8x384xf32>
    tpu.vector_store %arg7[%c0_25, %c0_26], %66 {strides = array<i32>} : memref<8x384xf32, #tpu.memory_space<vmem>>, vector<8x384xf32>,
    return
  }
  func.func @transform_0(%arg0: i32) -> (i32, i32) {
    %c0_i32 = arith.constant 0 : i32
    %c0_i32_0 = arith.constant 0 : i32
    %c0_i32_1 = arith.constant 0 : i32
    return %c0_i32, %c0_i32_0 : i32, i32
  }
  func.func @transform_1(%arg0: i32) -> (i32, i32) {
    %c0_i32 = arith.constant 0 : i32
    %c0_i32_0 = arith.constant 0 : i32
    %c0_i32_1 = arith.constant 0 : i32
    return %c0_i32, %c0_i32_0 : i32, i32
  }
  func.func @transform_2(%arg0: i32) -> (i32, i32) {
    %c0_i32 = arith.constant 0 : i32
    %c0_i32_0 = arith.constant 0 : i32
    %c0_i32_1 = arith.constant 0 : i32
    return %c0_i32, %c0_i32_0 : i32, i32
  }
  func.func @transform_3(%arg0: i32) -> (i32, i32) {
    %c0_i32 = arith.constant 0 : i32
    %c0_i32_0 = arith.constant 0 : i32
    %c0_i32_1 = arith.constant 0 : i32
    return %c0_i32, %c0_i32_0 : i32, i32
  }
  func.func @transform_4(%arg0: i32) -> (i32, i32) {
    %c0_i32 = arith.constant 0 : i32
    %c0_i32_0 = arith.constant 0 : i32
    return %c0_i32, %arg0 : i32, i32
  }
  func.func @transform_5(%arg0: i32) -> (i32, i32) {
    %c0_i32 = arith.constant 0 : i32
    %c0_i32_0 = arith.constant 0 : i32
    return %c0_i32, %arg0 : i32, i32
  }
  func.func @transform_6(%arg0: i32) -> (i32, i32) {
    %c0_i32 = arith.constant 0 : i32
    %c0_i32_0 = arith.constant 0 : i32
    return %c0_i32, %arg0 : i32, i32
  }
}

module attributes {stable_mosaic.version = 11 : i64} {
  func.func @_disc_kernel(%arg0: i32, %arg1: memref<8x32xbf16, #tpu.memory_space<vmem>>, %arg2: memref<32x32xbf16, #tpu.memory_space<vmem>>, %arg3: memref<32x32xbf16, #tpu.memory_space<vmem>>, %arg4: memref<8x32xf32, #tpu.memory_space<vmem>>, %arg5: memref<32x384xbf16, #tpu.memory_space<vmem>>, %arg6: memref<1x384xf32, #tpu.memory_space<vmem>>, %arg7: memref<8x384xf32, #tpu.memory_space<vmem>>) attributes {dimension_semantics = [#tpu.dimension_semantics<parallel>], iteration_bounds = array<i64: 1>, scalar_prefetch = 0 : i64, scratch_operands = 0 : i64, tpu.core_type = #tpu.core_type<tc>, window_params = [{pipeline_mode = #tpu.pipeline_mode<synchronous>, transform_indices = @transform_0, window_bounds = array<i64: 8, 32>}, {pipeline_mode = #tpu.pipeline_mode<synchronous>, transform_indices = @transform_1, window_bounds = array<i64: 32, 32>}, {pipeline_mode = #tpu.pipeline_mode<synchronous>, transform_indices = @transform_2, window_bounds = array<i64: 32, 32>}, {pipeline_mode = #tpu.pipeline_mode<synchronous>, transform_indices = @transform_3, window_bounds = array<i64: 8, 32>}, {transform_indices = @transform_4, window_bounds = array<i64: 32, 384>}, {transform_indices = @transform_5, window_bounds = array<i64: 1, 384>}, {transform_indices = @transform_6, window_bounds = array<i64: 8, 384>}]} {
    %c0 = arith.constant 0 : index
    %c0_0 = arith.constant 0 : index
    %0 = vector.load %arg4[%c0, %c0_0] : memref<8x32xf32, #tpu.memory_space<vmem>>, vector<8x32xf32>
    %c0_1 = arith.constant 0 : index
    %c0_2 = arith.constant 0 : index
    %1 = vector.load %arg1[%c0_1, %c0_2] : memref<8x32xbf16, #tpu.memory_space<vmem>>, vector<8x32xbf16>
    %c0_3 = arith.constant 0 : index
    %c0_4 = arith.constant 0 : index
    %2 = vector.load %arg2[%c0_3, %c0_4] : memref<32x32xbf16, #tpu.memory_space<vmem>>, vector<32x32xbf16>
    %cst = arith.constant dense<0.000000e+00> : vector<8x32xf32>
    %3 = tpu.matmul %1, %2, %cst {dimension_numbers = #tpu.dot_dimension_numbers<[1], [0], [0], [1], [0, 0, 1, 1], [], []>} : vector<8x32xbf16>, vector<32x32xbf16>, vector<8x32xf32> -> vector<8x32xf32>
    %4 = vector.extract_strided_slice %0 {offsets = [0, 0], sizes = [1, 32], strides = [1, 1]} : vector<8x32xf32> to vector<1x32xf32>
    %5 = vector.broadcast %4 : vector<1x32xf32> to vector<8x32xf32>
    %6 = arith.addf %3, %5 : vector<8x32xf32>
    %cst_5 = arith.constant dense<0.000000e+00> : vector<32xf32>
    %7 = vector.multi_reduction <add>, %6, %cst_5 [0] : vector<8x32xf32> to vector<32xf32>
    %8 = vector.shape_cast %7 : vector<32xf32> to vector<1x32xf32>
    %cst_6 = arith.constant 8.000000e+00 : f32
    %9 = vector.broadcast %cst_6 : f32 to vector<1x32xf32>
    %10 = arith.divf %8, %9 : vector<1x32xf32>
    %11 = vector.broadcast %10 : vector<1x32xf32> to vector<8x32xf32>
    %12 = arith.subf %6, %11 : vector<8x32xf32>
    %13 = arith.mulf %12, %12 : vector<8x32xf32>
    %cst_7 = arith.constant dense<0.000000e+00> : vector<32xf32>
    %14 = vector.multi_reduction <add>, %13, %cst_7 [0] : vector<8x32xf32> to vector<32xf32>
    %15 = vector.shape_cast %14 : vector<32xf32> to vector<1x32xf32>
    %cst_8 = arith.constant 8.000000e+00 : f32
    %16 = vector.broadcast %cst_8 : f32 to vector<1x32xf32>
    %17 = arith.divf %15, %16 : vector<1x32xf32>
    %cst_9 = arith.constant 9.99999974E-6 : f32
    %18 = vector.broadcast %cst_9 : f32 to vector<1x32xf32>
    %19 = arith.addf %17, %18 : vector<1x32xf32>
    %20 = math.rsqrt %19 : vector<1x32xf32>
    %21 = vector.broadcast %20 : vector<1x32xf32> to vector<8x32xf32>
    %22 = arith.mulf %12, %21 : vector<8x32xf32>
    %23 = vector.extract_strided_slice %0 {offsets = [1, 0], sizes = [1, 32], strides = [1, 1]} : vector<8x32xf32> to vector<1x32xf32>
    %24 = vector.broadcast %23 : vector<1x32xf32> to vector<8x32xf32>
    %25 = arith.mulf %22, %24 : vector<8x32xf32>
    %26 = vector.extract_strided_slice %0 {offsets = [2, 0], sizes = [1, 32], strides = [1, 1]} : vector<8x32xf32> to vector<1x32xf32>
    %27 = vector.broadcast %26 : vector<1x32xf32> to vector<8x32xf32>
    %28 = arith.addf %25, %27 : vector<8x32xf32>
    %cst_10 = arith.constant 0.000000e+00 : f32
    %29 = vector.broadcast %cst_10 : f32 to vector<8x32xf32>
    %30 = arith.maximumf %28, %29 : vector<8x32xf32>
    %31 = arith.truncf %30 : vector<8x32xf32> to vector<8x32xbf16>
    %c0_11 = arith.constant 0 : index
    %c0_12 = arith.constant 0 : index
    %32 = vector.load %arg3[%c0_11, %c0_12] : memref<32x32xbf16, #tpu.memory_space<vmem>>, vector<32x32xbf16>
    %cst_13 = arith.constant dense<0.000000e+00> : vector<8x32xf32>
    %33 = tpu.matmul %31, %32, %cst_13 {dimension_numbers = #tpu.dot_dimension_numbers<[1], [0], [0], [1], [0, 0, 1, 1], [], []>} : vector<8x32xbf16>, vector<32x32xbf16>, vector<8x32xf32> -> vector<8x32xf32>
    %34 = vector.extract_strided_slice %0 {offsets = [3, 0], sizes = [1, 32], strides = [1, 1]} : vector<8x32xf32> to vector<1x32xf32>
    %35 = vector.broadcast %34 : vector<1x32xf32> to vector<8x32xf32>
    %36 = arith.addf %33, %35 : vector<8x32xf32>
    %cst_14 = arith.constant dense<0.000000e+00> : vector<32xf32>
    %37 = vector.multi_reduction <add>, %36, %cst_14 [0] : vector<8x32xf32> to vector<32xf32>
    %38 = vector.shape_cast %37 : vector<32xf32> to vector<1x32xf32>
    %cst_15 = arith.constant 8.000000e+00 : f32
    %39 = vector.broadcast %cst_15 : f32 to vector<1x32xf32>
    %40 = arith.divf %38, %39 : vector<1x32xf32>
    %41 = vector.broadcast %40 : vector<1x32xf32> to vector<8x32xf32>
    %42 = arith.subf %36, %41 : vector<8x32xf32>
    %43 = arith.mulf %42, %42 : vector<8x32xf32>
    %cst_16 = arith.constant dense<0.000000e+00> : vector<32xf32>
    %44 = vector.multi_reduction <add>, %43, %cst_16 [0] : vector<8x32xf32> to vector<32xf32>
    %45 = vector.shape_cast %44 : vector<32xf32> to vector<1x32xf32>
    %cst_17 = arith.constant 8.000000e+00 : f32
    %46 = vector.broadcast %cst_17 : f32 to vector<1x32xf32>
    %47 = arith.divf %45, %46 : vector<1x32xf32>
    %cst_18 = arith.constant 9.99999974E-6 : f32
    %48 = vector.broadcast %cst_18 : f32 to vector<1x32xf32>
    %49 = arith.addf %47, %48 : vector<1x32xf32>
    %50 = math.rsqrt %49 : vector<1x32xf32>
    %51 = vector.broadcast %50 : vector<1x32xf32> to vector<8x32xf32>
    %52 = arith.mulf %42, %51 : vector<8x32xf32>
    %53 = vector.extract_strided_slice %0 {offsets = [4, 0], sizes = [1, 32], strides = [1, 1]} : vector<8x32xf32> to vector<1x32xf32>
    %54 = vector.broadcast %53 : vector<1x32xf32> to vector<8x32xf32>
    %55 = arith.mulf %52, %54 : vector<8x32xf32>
    %56 = vector.extract_strided_slice %0 {offsets = [5, 0], sizes = [1, 32], strides = [1, 1]} : vector<8x32xf32> to vector<1x32xf32>
    %57 = vector.broadcast %56 : vector<1x32xf32> to vector<8x32xf32>
    %58 = arith.addf %55, %57 : vector<8x32xf32>
    %cst_19 = arith.constant 0.000000e+00 : f32
    %59 = vector.broadcast %cst_19 : f32 to vector<8x32xf32>
    %60 = arith.maximumf %58, %59 : vector<8x32xf32>
    %61 = arith.truncf %60 : vector<8x32xf32> to vector<8x32xbf16>
    %c0_20 = arith.constant 0 : index
    %c0_21 = arith.constant 0 : index
    %62 = vector.load %arg5[%c0_20, %c0_21] : memref<32x384xbf16, #tpu.memory_space<vmem>>, vector<32x384xbf16>
    %cst_22 = arith.constant dense<0.000000e+00> : vector<8x384xf32>
    %63 = tpu.matmul %61, %62, %cst_22 {dimension_numbers = #tpu.dot_dimension_numbers<[1], [0], [0], [1], [0, 0, 1, 1], [], []>} : vector<8x32xbf16>, vector<32x384xbf16>, vector<8x384xf32> -> vector<8x384xf32>
    %c0_23 = arith.constant 0 : index
    %c0_24 = arith.constant 0 : index
    %64 = vector.load %arg6[%c0_23, %c0_24] : memref<1x384xf32, #tpu.memory_space<vmem>>, vector<1x384xf32>
    %65 = vector.broadcast %64 : vector<1x384xf32> to vector<8x384xf32>
    %66 = arith.addf %63, %65 : vector<8x384xf32>
    %c0_25 = arith.constant 0 : index
    %c0_26 = arith.constant 0 : index
    %67 = vector.load %arg7[%c0_25, %c0_26] : memref<8x384xf32, #tpu.memory_space<vmem>>, vector<8x384xf32>
    tpu.vector_store %arg7[%c0_25, %c0_26], %66 {strides = array<i32>} : memref<8x384xf32, #tpu.memory_space<vmem>>, vector<8x384xf32>,
    return
  }
  func.func @transform_0(%arg0: i32) -> (i32, i32) {
    %c0_i32 = arith.constant 0 : i32
    %c0_i32_0 = arith.constant 0 : i32
    %c0_i32_1 = arith.constant 0 : i32
    return %c0_i32, %c0_i32_0 : i32, i32
  }
  func.func @transform_1(%arg0: i32) -> (i32, i32) {
    %c0_i32 = arith.constant 0 : i32
    %c0_i32_0 = arith.constant 0 : i32
    %c0_i32_1 = arith.constant 0 : i32
    return %c0_i32, %c0_i32_0 : i32, i32
  }
  func.func @transform_2(%arg0: i32) -> (i32, i32) {
    %c0_i32 = arith.constant 0 : i32
    %c0_i32_0 = arith.constant 0 : i32
    %c0_i32_1 = arith.constant 0 : i32
    return %c0_i32, %c0_i32_0 : i32, i32
  }
  func.func @transform_3(%arg0: i32) -> (i32, i32) {
    %c0_i32 = arith.constant 0 : i32
    %c0_i32_0 = arith.constant 0 : i32
    %c0_i32_1 = arith.constant 0 : i32
    return %c0_i32, %c0_i32_0 : i32, i32
  }
  func.func @transform_4(%arg0: i32) -> (i32, i32) {
    %c0_i32 = arith.constant 0 : i32
    %c0_i32_0 = arith.constant 0 : i32
    return %c0_i32, %arg0 : i32, i32
  }
  func.func @transform_5(%arg0: i32) -> (i32, i32) {
    %c0_i32 = arith.constant 0 : i32
    %c0_i32_0 = arith.constant 0 : i32
    return %c0_i32, %arg0 : i32, i32
  }
  func.func @transform_6(%arg0: i32) -> (i32, i32) {
    %c0_i32 = arith.constant 0 : i32
    %c0_i32_0 = arith.constant 0 : i32
    return %c0_i32, %arg0 : i32, i32
  }
}

</mosaic_0001>

<llo_original>
// kernel: tpu_custom_call.1
$region0: #{tpu_custom_call.1}
  #allocation0 [shape = 'u32[]', space=smem, size = 0x4, offset = 0x4, fixed_abs, tag = 'smem constant byte address 0x4 - core index']
  #allocation1 [shape = 'u32[72,128]{1,0:T(1,128)}', space=vmem, size = 0x9000, scoped, tag = 'internal scratch']
  %s0 = inlined_call_operand.hbm [shape: bf16[8,32], index: 0, kind: input, shape index: {}]
  %s1 = inlined_call_operand.hbm [shape: bf16[32,32], index: 1, kind: input, shape index: {}]
  %s2 = inlined_call_operand.hbm [shape: bf16[32,32], index: 2, kind: input, shape index: {}]
  %s3 = inlined_call_operand.hbm [shape: f32[8,32], index: 3, kind: input, shape index: {}]
  %s4 = inlined_call_operand.hbm [shape: bf16[32,384], index: 4, kind: input, shape index: {}]
  %s5 = inlined_call_operand.vmem [shape: f32[1,384], index: 5, kind: input, shape index: {}]
  %s6 = inlined_call_operand.hbm [shape: f32[8,384], index: 6, kind: output, shape index: {}]
  %s7 = sld [smem:[#allocation0]]
  $region54: #{tpu_custom_call.1} parent=0
    _
  %s9 = ssub.s32 1, %s7
  %s10 = scalar_select 0, %s9, %s7
  $region1: #{tpu_custom_call.1} parent=0
    #allocation2 [shape = 'u8[2048]{0}', space=vmem, size = 0x800, scoped, tag = 'input window, operand 0, single buffered']
    #allocation3 [shape = 's32[1]{0}', space=sflag, size = 0x4, scoped, tag = 'scoped memory for tpu_custom_call.1']
    #allocation4 [shape = 's32[1]{0}', space=sflag, size = 0x4, scoped, tag = 'scoped memory for tpu_custom_call.1']
    #allocation5 [shape = 'u8[8192]{0}', space=vmem, size = 0x2000, scoped, tag = 'input window, operand 1, single buffered']
    #allocation6 [shape = 's32[1]{0}', space=sflag, size = 0x4, scoped, tag = 'scoped memory for tpu_custom_call.1']
    #allocation7 [shape = 'u8[8192]{0}', space=vmem, size = 0x2000, scoped, tag = 'input window, operand 2, single buffered']
    #allocation8 [shape = 'u8[4096]{0}', space=vmem, size = 0x1000, scoped, tag = 'input window, operand 3, single buffered']
    #allocation9 [shape = 's32[1]{0}', space=sflag, size = 0x4, scoped, tag = 'scoped memory for tpu_custom_call.1']
    #allocation10 [shape = 'u8[24576]{0}', space=vmem, size = 0x6000, scoped, tag = 'input window, operand 4, single buffered']
    #allocation11 [shape = 'u8[12288]{0}', space=vmem, size = 0x3000, scoped, tag = 'output window, operand 0, single buffered']
    %11 = vsyncpa [#allocation3], 0
    %12 = vsyncpa [#allocation6], 0
    %13 = vsyncpa [#allocation9], 0
    %14 = vsyncpa [#allocation4], 0
    // Predicated region
    $region2: #{tpu_custom_call.1} parent=1 // pred_check
      _
    $region3: #{tpu_custom_call.1} parent=1 // pred_check_branch
      %16 = sbr.rel (0) target = $region5
    $region4: #{tpu_custom_call.1} parent=1 // pred_region
      %18 = vsyncadd [#allocation3], 0
      %s20 = sshll.u32 %s0, 4
      %s21 = int_to_ptr.hbm [resolvable:$true] %s20
      %s22 = sshll.u32 [#allocation2], 4
      %s23 = int_to_ptr.vmem [resolvable:$true] %s22
      %25 = dma.hbm_to_vmem [thread:$0]  %s21, 64, %s23, [#allocation3]
    $region5: #{tpu_custom_call.1} parent=1 // pred_fallthru
      _
    // Predicated region
    $region6: #{tpu_custom_call.1} parent=1 // pred_check
      _
    $region7: #{tpu_custom_call.1} parent=1 // pred_check_branch
      %27 = sbr.rel (0) target = $region9
    $region8: #{tpu_custom_call.1} parent=1 // pred_region
      %29 = vsyncadd [#allocation6], 0
      %s30 = sshll.u32 %s1, 4
      %s31 = int_to_ptr.hbm [resolvable:$true] %s30
      %s32 = sshll.u32 [#allocation5], 4
      %s33 = int_to_ptr.vmem [resolvable:$true] %s32
      %38 = dma.hbm_to_vmem [thread:$0]  %s31, 256, %s33, [#allocation6], 64, 64, 4
    $region9: #{tpu_custom_call.1} parent=1 // pred_fallthru
      _
    // Predicated region
    $region10: #{tpu_custom_call.1} parent=1 // pred_check
      _
    $region11: #{tpu_custom_call.1} parent=1 // pred_check_branch
      %40 = sbr.rel (0) target = $region13
    $region12: #{tpu_custom_call.1} parent=1 // pred_region
      %42 = vsyncadd [#allocation6], 0
      %s43 = sshll.u32 %s2, 4
      %s44 = int_to_ptr.hbm [resolvable:$true] %s43
      %s45 = sshll.u32 [#allocation7], 4
      %s46 = int_to_ptr.vmem [resolvable:$true] %s45
      %51 = dma.hbm_to_vmem [thread:$0]  %s44, 256, %s46, [#allocation6], 64, 64, 4
    $region13: #{tpu_custom_call.1} parent=1 // pred_fallthru
      _
    // Predicated region
    $region14: #{tpu_custom_call.1} parent=1 // pred_check
      _
    $region15: #{tpu_custom_call.1} parent=1 // pred_check_branch
      %53 = sbr.rel (0) target = $region17
    $region16: #{tpu_custom_call.1} parent=1 // pred_region
      %55 = vsyncadd [#allocation9], 0
      %s57 = sshll.u32 %s3, 4
      %s58 = int_to_ptr.hbm [resolvable:$true] %s57
      %s59 = sshll.u32 [#allocation8], 4
      %s60 = int_to_ptr.vmem [resolvable:$true] %s59
      %62 = dma.hbm_to_vmem [thread:$0]  %s58, 128, %s60, [#allocation9]
    $region17: #{tpu_custom_call.1} parent=1 // pred_fallthru
      _
    // Predicated region
    $region18: #{tpu_custom_call.1} parent=1 // pred_check
      _
    $region19: #{tpu_custom_call.1} parent=1 // pred_check_branch
      %64 = sbr.rel (0) target = $region21
    $region20: #{tpu_custom_call.1} parent=1 // pred_region
      %66 = vsyncadd [#allocation9], 0
      %s67 = sshll.u32 %s4, 4
      %s68 = int_to_ptr.hbm [resolvable:$true] %s67
      %s69 = sshll.u32 [#allocation10], 4
      %s70 = int_to_ptr.vmem [resolvable:$true] %s69
      %75 = dma.hbm_to_vmem [thread:$0]  %s68, 768, %s70, [#allocation9], 192, 192, 12
    $region21: #{tpu_custom_call.1} parent=1 // pred_fallthru
      _
    // Predicated region
    $region22: #{tpu_custom_call.1} parent=1 // pred_check
      _
    $region23: #{tpu_custom_call.1} parent=1 // pred_check_branch
      %77 = sbr.rel (0) target = $region25
    $region24: #{tpu_custom_call.1} parent=1 // pred_region
      _
    $region25: #{tpu_custom_call.1} parent=1 // pred_fallthru
      _
    // Predicated region
    $region26: #{tpu_custom_call.1} parent=1 // pred_check
      _
    $region27: #{tpu_custom_call.1} parent=1 // pred_check_branch
      %79 = sbr.rel (0) target = $region29
    $region28: #{tpu_custom_call.1} parent=1 // pred_region
      %81 = dma.done [#allocation3], 64
    $region29: #{tpu_custom_call.1} parent=1 // pred_fallthru
      _
    // Predicated region
    $region30: #{tpu_custom_call.1} parent=1 // pred_check
      _
    $region31: #{tpu_custom_call.1} parent=1 // pred_check_branch
      %83 = sbr.rel (0) target = $region33
    $region32: #{tpu_custom_call.1} parent=1 // pred_region
      %85 = dma.done [#allocation6], 256
    $region33: #{tpu_custom_call.1} parent=1 // pred_fallthru
      _
    // Predicated region
    $region34: #{tpu_custom_call.1} parent=1 // pred_check
      _
    $region35: #{tpu_custom_call.1} parent=1 // pred_check_branch
      %87 = sbr.rel (0) target = $region37
    $region36: #{tpu_custom_call.1} parent=1 // pred_region
      %89 = dma.done [#allocation6], 256
    $region37: #{tpu_custom_call.1} parent=1 // pred_fallthru
      _
    // Predicated region
    $region38: #{tpu_custom_call.1} parent=1 // pred_check
      _
    $region39: #{tpu_custom_call.1} parent=1 // pred_check_branch
      %91 = sbr.rel (0) target = $region41
    $region40: #{tpu_custom_call.1} parent=1 // pred_region
      %93 = dma.done [#allocation9], 128
    $region41: #{tpu_custom_call.1} parent=1 // pred_fallthru
      _
    // Predicated region
    $region42: #{tpu_custom_call.1} parent=1 // pred_check
      _
    $region43: #{tpu_custom_call.1} parent=1 // pred_check_branch
      %95 = sbr.rel (0) target = $region45
    $region44: #{tpu_custom_call.1} parent=1 // pred_region
      %97 = dma.done [#allocation9], 768
    $region45: #{tpu_custom_call.1} parent=1 // pred_fallthru
      _
    %v99 = vld [vmem:[#allocation8] sm:$0xff]
    %v100 = vld [vmem:[#allocation2] sm:$0xf]
    %v101 = vld [vmem:[#allocation5] sm:$0xf]
    %v102 = vld [vmem:[#allocation5 + $0x4] sm:$0xf]
    %v103 = vld [vmem:[#allocation5 + $0x8] sm:$0xf]
    %v104 = vld [vmem:[#allocation5 + $0xc] sm:$0xf]
    %v105 = vperm.slane %v99, 0
    %v110 = vunpack.c.l.b16 %v101
    %v111 = vunpack.c.l.b16 %v102
    %v112 = vunpack.c.l.b16 %v103
    %v113 = vunpack.c.l.b16 %v104
    %v114 = vpack.c.b16 %v111, %v110
    %v115 = vpack.c.b16 %v113, %v112
    %vm118 = vcmask 261120
    %v120 = vsel %vm118, %v100, 0
    %122 = vmatpush.bf16.msra.mxu0 0
    %123 = vmatpush.bf16.msra.mxu0 0
    %124 = vmatpush.bf16.msra.mxu0 0
    %125 = vmatpush.bf16.msra.mxu0 0
    %126 = vmatpush.bf16.msra.mxu0 0
    %127 = vmatpush.bf16.msra.mxu0 0
    %128 = vmatpush.bf16.msra.mxu0 %v115
    %129 = vmatpush.bf16.msra.mxu0 %v114
    %130 = vmatmul.bf16.gmra.mxu0 %v120
    %v131 = vpop.f32.mrf.mxu0
    %v132 = vadd.f32 %v105, %v131
    %v133 = vpop.f32.mrf.mxu0
    %134 = vdwg.mxu0
    %v135 = vsel %vm118, %v132, 0.0
    %v136 = vrot.slane %v135, 4
    %v137 = vadd.f32 %v135, %v136
    %v138 = vrot.slane %v137, 2
    %v139 = vadd.f32 %v137, %v138
    %v140 = vrot.slane %v139, 1
    %v141 = vadd.f32 %v139, %v140
    %v142 = vrcp.pop 8.0
    %v143 = vmul.f32 8.0, %v142
    %v144 = vsub.f32 1.0, %v143
    %v145 = vmul.f32 %v142, %v144
    %v146 = vadd.f32 %v142, %v145
    %vm147 = vweird.f32 %v142
    %v148 = vsel %vm147, %v142, %v146
    %v149 = vmul.f32 %v141, %v148
    %v150 = vsub.f32 %v132, %v149
    %v151 = vmul.f32 %v150, %v150
    %v152 = vsel %vm118, %v151, 0.0
    %v153 = vrot.slane %v152, 4
    %v154 = vadd.f32 %v152, %v153
    %v155 = vrot.slane %v154, 2
    %v156 = vadd.f32 %v154, %v155
    %v157 = vrot.slane %v156, 1
    %v158 = vadd.f32 %v156, %v157
    %v159 = vmul.f32 %v158, %v148
    %v160 = vadd.f32 %v159, 1e-05
    %v161 = vrsqrt.pop %v160
    %v162 = vmul.f32 %v161, %v160
    %v163 = vmul.f32 %v162, %v161
    %v164 = vmul.f32 0.5, %v163
    %v165 = vsub.f32 1.5, %v164
    %v166 = vmul.f32 %v161, %v165
    %vm167 = vweird.f32 %v160
    %vm168 = vweird.f32 %v161
    %vm169 = vmor %vm167, %vm168
    %v170 = vsel %vm169, %v161, %v166
    %v171 = vmul.f32 %v150, %v170
    %v172 = vperm.slane %v99, 1
    %v173 = vmul.f32 %v171, %v172
    %v174 = vperm.slane %v99, 2
    %v175 = vadd.f32 %v173, %v174
    %v176 = vmax.f32 %v175, 0.0
    %v177 = vpack.c.bf16 %v176, %v176
    %v178 = vld [vmem:[#allocation7] sm:$0xf]
    %v179 = vld [vmem:[#allocation7 + $0x4] sm:$0xf]
    %v180 = vld [vmem:[#allocation7 + $0x8] sm:$0xf]
    %v181 = vld [vmem:[#allocation7 + $0xc] sm:$0xf]
    %v182 = vperm.slane %v99, 3
    %v187 = vunpack.c.l.b16 %v178
    %v188 = vunpack.c.l.b16 %v179
    %v189 = vunpack.c.l.b16 %v180
    %v190 = vunpack.c.l.b16 %v181
    %v191 = vpack.c.b16 %v188, %v187
    %v192 = vpack.c.b16 %v190, %v189
    %v196 = vsel %vm118, %v177, 0
    %198 = vmatpush.bf16.msra.mxu0 0
    %199 = vmatpush.bf16.msra.mxu0 0
    %200 = vmatpush.bf16.msra.mxu0 0
    %201 = vmatpush.bf16.msra.mxu0 0
    %202 = vmatpush.bf16.msra.mxu0 0
    %203 = vmatpush.bf16.msra.mxu0 0
    %204 = vmatpush.bf16.msra.mxu0 %v192
    %205 = vmatpush.bf16.msra.mxu0 %v191
    %206 = vmatmul.bf16.gmra.mxu0 %v196
    %v207 = vpop.f32.mrf.mxu0
    %v208 = vadd.f32 %v182, %v207
    %v209 = vpop.f32.mrf.mxu0
    %210 = vdwg.mxu0
    %v211 = vsel %vm118, %v208, 0.0
    %v212 = vrot.slane %v211, 4
    %v213 = vadd.f32 %v211, %v212
    %v214 = vrot.slane %v213, 2
    %v215 = vadd.f32 %v213, %v214
    %v216 = vrot.slane %v215, 1
    %v217 = vadd.f32 %v215, %v216
    %v218 = vmul.f32 %v217, %v148
    %v219 = vsub.f32 %v208, %v218
    %v220 = vmul.f32 %v219, %v219
    %v221 = vsel %vm118, %v220, 0.0
    %v222 = vrot.slane %v221, 4
    %v223 = vadd.f32 %v221, %v222
    %v224 = vrot.slane %v223, 2
    %v225 = vadd.f32 %v223, %v224
    %v226 = vrot.slane %v225, 1
    %v227 = vadd.f32 %v225, %v226
    %v228 = vmul.f32 %v227, %v148
    %v229 = vadd.f32 %v228, 1e-05
    %v230 = vrsqrt.pop %v229
    %v231 = vmul.f32 %v230, %v229
    %v232 = vmul.f32 %v231, %v230
    %v233 = vmul.f32 0.5, %v232
    %v234 = vsub.f32 1.5, %v233
    %v235 = vmul.f32 %v230, %v234
    %vm236 = vweird.f32 %v229
    %vm237 = vweird.f32 %v230
    %vm238 = vmor %vm236, %vm237
    %v239 = vsel %vm238, %v230, %v235
    %v240 = vmul.f32 %v219, %v239
    %v241 = vperm.slane %v99, 4
    %v242 = vmul.f32 %v240, %v241
    %v243 = vperm.slane %v99, 5
    %v244 = vadd.f32 %v242, %v243
    %v245 = vmax.f32 %v244, 0.0
    %v246 = vpack.c.bf16 %v245, %v245
    %v247 = vld [vmem:[#allocation10] sm:$0xff]
    %v248 = vld [vmem:[#allocation10 + $0x8] sm:$0xf]
    %v249 = vld [vmem:[#allocation10 + $0xc] sm:$0xff]
    %v250 = vld [vmem:[#allocation10 + $0x14] sm:$0xf]
    %v251 = vld [vmem:[#allocation10 + $0x18] sm:$0xff]
    %v252 = vld [vmem:[#allocation10 + $0x20] sm:$0xf]
    %v253 = vld [vmem:[#allocation10 + $0x24] sm:$0xff]
    %v254 = vld [vmem:[#allocation10 + $0x2c] sm:$0xf]
    %v255 = vld [vmem:[%s5] sm:$0x7]
    %v257 = vperm.slane %v255, 0
    %v258 = vperm.slane %v255, 1
    %v259 = vperm.slane %v255, 2
    %v271 = vunpack.c.l.b16 %v247
    %v272 = vunpack.c.h.b16 %v247
    %v273 = vunpack.c.l.b16 %v248
    %v274 = vunpack.c.l.b16 %v249
    %v275 = vunpack.c.h.b16 %v249
    %v276 = vunpack.c.l.b16 %v250
    %v277 = vunpack.c.l.b16 %v251
    %v278 = vunpack.c.h.b16 %v251
    %v279 = vunpack.c.l.b16 %v252
    %v280 = vunpack.c.l.b16 %v253
    %v281 = vunpack.c.h.b16 %v253
    %v282 = vunpack.c.l.b16 %v254
    %v283 = vpack.c.b16 %v274, %v271
    %v284 = vpack.c.b16 %v275, %v272
    %v285 = vpack.c.b16 %v276, %v273
    %v286 = vpack.c.b16 %v280, %v277
    %v287 = vpack.c.b16 %v281, %v278
    %v288 = vpack.c.b16 %v282, %v279
    %v296 = vsel %vm118, %v246, 0
    %298 = vmatpush.bf16.msra.mxu0 0
    %299 = vmatpush.bf16.msra.mxu0 0
    %300 = vmatpush.bf16.msra.mxu0 0
    %301 = vmatpush.bf16.msra.mxu0 0
    %302 = vmatpush.bf16.msra.mxu0 0
    %303 = vmatpush.bf16.msra.mxu0 0
    %304 = vmatpush.bf16.msra.mxu0 %v286
    %305 = vmatpush.bf16.msra.mxu0 %v283
    %306 = vmatmul.bf16.gmra.mxu0 %v296
    %v307 = vpop.f32.mrf.mxu0
    %v308 = vadd.f32 %v257, %v307
    %v309 = vpop.f32.mrf.mxu0
    %310 = vdwg.mxu0
    %311 = vmatpush.bf16.msra.mxu0 0
    %312 = vmatpush.bf16.msra.mxu0 0
    %313 = vmatpush.bf16.msra.mxu0 0
    %314 = vmatpush.bf16.msra.mxu0 0
    %315 = vmatpush.bf16.msra.mxu0 0
    %316 = vmatpush.bf16.msra.mxu0 0
    %317 = vmatpush.bf16.msra.mxu0 %v287
    %318 = vmatpush.bf16.msra.mxu0 %v284
    %319 = vmatmul.bf16.gmra.mxu0 %v296
    %v320 = vpop.f32.mrf.mxu0
    %v321 = vadd.f32 %v258, %v320
    %v322 = vpop.f32.mrf.mxu0
    %323 = vdwg.mxu0
    %324 = vmatpush.bf16.msra.mxu0 0
    %325 = vmatpush.bf16.msra.mxu0 0
    %326 = vmatpush.bf16.msra.mxu0 0
    %327 = vmatpush.bf16.msra.mxu0 0
    %328 = vmatpush.bf16.msra.mxu0 0
    %329 = vmatpush.bf16.msra.mxu0 0
    %330 = vmatpush.bf16.msra.mxu0 %v288
    %331 = vmatpush.bf16.msra.mxu0 %v285
    %332 = vmatmul.bf16.gmra.mxu0 %v296
    %v333 = vpop.f32.mrf.mxu0
    %v334 = vadd.f32 %v259, %v333
    %v335 = vpop.f32.mrf.mxu0
    %336 = vdwg.mxu0
    %337 = vst [vmem:[#allocation11] sm:$0xff] %v308
    %338 = vst [vmem:[#allocation11 + $0x8] sm:$0xff] %v321
    %339 = vst [vmem:[#allocation11 + $0x10] sm:$0xff] %v334
    // Predicated region
    $region46: #{tpu_custom_call.1} parent=1 // pred_check
      _
    $region47: #{tpu_custom_call.1} parent=1 // pred_check_branch
      %341 = sbr.rel (0) target = $region49
    $region48: #{tpu_custom_call.1} parent=1 // pred_region
      %343 = vsyncadd [#allocation4], 0
      %s345 = sshll.u32 [#allocation11], 4
      %s346 = int_to_ptr.vmem [resolvable:$true] %s345
      %s347 = sshll.u32 %s6, 4
      %s348 = int_to_ptr.hbm [resolvable:$true] %s347
      %350 = dma.vmem_to_hbm [thread:$0]  %s346, 384, %s348, [#allocation4]
    $region49: #{tpu_custom_call.1} parent=1 // pred_fallthru
      _
    // Predicated region
    $region50: #{tpu_custom_call.1} parent=1 // pred_check
      _
    $region51: #{tpu_custom_call.1} parent=1 // pred_check_branch
      %352 = sbr.rel (0) target = $region53
    $region52: #{tpu_custom_call.1} parent=1 // pred_region
      %354 = dma.done [#allocation4], 384
    $region53: #{tpu_custom_call.1} parent=1 // pred_fallthru
      _
    %355 = vsyncpa [#allocation3], 1
    %356 = vsyncpa [#allocation6], 1
    %357 = vsyncpa [#allocation9], 1
    %358 = vsyncpa [#allocation4], 1

// kernel: tpu_custom_call.1
$region0: #{tpu_custom_call.1}
  #allocation0 [shape = 'u32[]', space=smem, size = 0x4, offset = 0x4, fixed_abs, tag = 'smem constant byte address 0x4 - core index']
  #allocation1 [shape = 'u32[72,128]{1,0:T(1,128)}', space=vmem, size = 0x9000, scoped, tag = 'internal scratch']
  %s0 = inlined_call_operand.hbm [shape: bf16[8,32], index: 0, kind: input, shape index: {}]
  %s1 = inlined_call_operand.hbm [shape: bf16[32,32], index: 1, kind: input, shape index: {}]
  %s2 = inlined_call_operand.hbm [shape: bf16[32,32], index: 2, kind: input, shape index: {}]
  %s3 = inlined_call_operand.hbm [shape: f32[8,32], index: 3, kind: input, shape index: {}]
  %s4 = inlined_call_operand.hbm [shape: bf16[32,384], index: 4, kind: input, shape index: {}]
  %s5 = inlined_call_operand.vmem [shape: f32[1,384], index: 5, kind: input, shape index: {}]
  %s6 = inlined_call_operand.hbm [shape: f32[8,384], index: 6, kind: output, shape index: {}]
  %s7 = sld [smem:[#allocation0]]
  $region54: #{tpu_custom_call.1} parent=0
    _
  %s9 = ssub.s32 1, %s7
  %s10 = scalar_select 0, %s9, %s7
  $region1: #{tpu_custom_call.1} parent=0
    #allocation2 [shape = 'u8[2048]{0}', space=vmem, size = 0x800, scoped, tag = 'input window, operand 0, single buffered']
    #allocation3 [shape = 's32[1]{0}', space=sflag, size = 0x4, scoped, tag = 'scoped memory for tpu_custom_call.1']
    #allocation4 [shape = 's32[1]{0}', space=sflag, size = 0x4, scoped, tag = 'scoped memory for tpu_custom_call.1']
    #allocation5 [shape = 'u8[8192]{0}', space=vmem, size = 0x2000, scoped, tag = 'input window, operand 1, single buffered']
    #allocation6 [shape = 's32[1]{0}', space=sflag, size = 0x4, scoped, tag = 'scoped memory for tpu_custom_call.1']
    #allocation7 [shape = 'u8[8192]{0}', space=vmem, size = 0x2000, scoped, tag = 'input window, operand 2, single buffered']
    #allocation8 [shape = 'u8[4096]{0}', space=vmem, size = 0x1000, scoped, tag = 'input window, operand 3, single buffered']
    #allocation9 [shape = 's32[1]{0}', space=sflag, size = 0x4, scoped, tag = 'scoped memory for tpu_custom_call.1']
    #allocation10 [shape = 'u8[24576]{0}', space=vmem, size = 0x6000, scoped, tag = 'input window, operand 4, single buffered']
    #allocation11 [shape = 'u8[12288]{0}', space=vmem, size = 0x3000, scoped, tag = 'output window, operand 0, single buffered']
    %11 = vsyncpa [#allocation3], 0
    %12 = vsyncpa [#allocation6], 0
    %13 = vsyncpa [#allocation9], 0
    %14 = vsyncpa [#allocation4], 0
    // Predicated region
    $region2: #{tpu_custom_call.1} parent=1 // pred_check
      _
    $region3: #{tpu_custom_call.1} parent=1 // pred_check_branch
      %16 = sbr.rel (0) target = $region5
    $region4: #{tpu_custom_call.1} parent=1 // pred_region
      %18 = vsyncadd [#allocation3], 0
      %s20 = sshll.u32 %s0, 4
      %s21 = int_to_ptr.hbm [resolvable:$true] %s20
      %s22 = sshll.u32 [#allocation2], 4
      %s23 = int_to_ptr.vmem [resolvable:$true] %s22
      %25 = dma.hbm_to_vmem [thread:$0]  %s21, 64, %s23, [#allocation3]
    $region5: #{tpu_custom_call.1} parent=1 // pred_fallthru
      _
    // Predicated region
    $region6: #{tpu_custom_call.1} parent=1 // pred_check
      _
    $region7: #{tpu_custom_call.1} parent=1 // pred_check_branch
      %27 = sbr.rel (0) target = $region9
    $region8: #{tpu_custom_call.1} parent=1 // pred_region
      %29 = vsyncadd [#allocation6], 0
      %s30 = sshll.u32 %s1, 4
      %s31 = int_to_ptr.hbm [resolvable:$true] %s30
      %s32 = sshll.u32 [#allocation5], 4
      %s33 = int_to_ptr.vmem [resolvable:$true] %s32
      %38 = dma.hbm_to_vmem [thread:$0]  %s31, 256, %s33, [#allocation6], 64, 64, 4
    $region9: #{tpu_custom_call.1} parent=1 // pred_fallthru
      _
    // Predicated region
    $region10: #{tpu_custom_call.1} parent=1 // pred_check
      _
    $region11: #{tpu_custom_call.1} parent=1 // pred_check_branch
      %40 = sbr.rel (0) target = $region13
    $region12: #{tpu_custom_call.1} parent=1 // pred_region
      %42 = vsyncadd [#allocation6], 0
      %s43 = sshll.u32 %s2, 4
      %s44 = int_to_ptr.hbm [resolvable:$true] %s43
      %s45 = sshll.u32 [#allocation7], 4
      %s46 = int_to_ptr.vmem [resolvable:$true] %s45
      %51 = dma.hbm_to_vmem [thread:$0]  %s44, 256, %s46, [#allocation6], 64, 64, 4
    $region13: #{tpu_custom_call.1} parent=1 // pred_fallthru
      _
    // Predicated region
    $region14: #{tpu_custom_call.1} parent=1 // pred_check
      _
    $region15: #{tpu_custom_call.1} parent=1 // pred_check_branch
      %53 = sbr.rel (0) target = $region17
    $region16: #{tpu_custom_call.1} parent=1 // pred_region
      %55 = vsyncadd [#allocation9], 0
      %s57 = sshll.u32 %s3, 4
      %s58 = int_to_ptr.hbm [resolvable:$true] %s57
      %s59 = sshll.u32 [#allocation8], 4
      %s60 = int_to_ptr.vmem [resolvable:$true] %s59
      %62 = dma.hbm_to_vmem [thread:$0]  %s58, 128, %s60, [#allocation9]
    $region17: #{tpu_custom_call.1} parent=1 // pred_fallthru
      _
    // Predicated region
    $region18: #{tpu_custom_call.1} parent=1 // pred_check
      _
    $region19: #{tpu_custom_call.1} parent=1 // pred_check_branch
      %64 = sbr.rel (0) target = $region21
    $region20: #{tpu_custom_call.1} parent=1 // pred_region
      %66 = vsyncadd [#allocation9], 0
      %s67 = sshll.u32 %s4, 4
      %s68 = int_to_ptr.hbm [resolvable:$true] %s67
      %s69 = sshll.u32 [#allocation10], 4
      %s70 = int_to_ptr.vmem [resolvable:$true] %s69
      %75 = dma.hbm_to_vmem [thread:$0]  %s68, 768, %s70, [#allocation9], 192, 192, 12
    $region21: #{tpu_custom_call.1} parent=1 // pred_fallthru
      _
    // Predicated region
    $region22: #{tpu_custom_call.1} parent=1 // pred_check
      _
    $region23: #{tpu_custom_call.1} parent=1 // pred_check_branch
      %77 = sbr.rel (0) target = $region25
    $region24: #{tpu_custom_call.1} parent=1 // pred_region
      _
    $region25: #{tpu_custom_call.1} parent=1 // pred_fallthru
      _
    // Predicated region
    $region26: #{tpu_custom_call.1} parent=1 // pred_check
      _
    $region27: #{tpu_custom_call.1} parent=1 // pred_check_branch
      %79 = sbr.rel (0) target = $region29
    $region28: #{tpu_custom_call.1} parent=1 // pred_region
      %81 = dma.done [#allocation3], 64
    $region29: #{tpu_custom_call.1} parent=1 // pred_fallthru
      _
    // Predicated region
    $region30: #{tpu_custom_call.1} parent=1 // pred_check
      _
    $region31: #{tpu_custom_call.1} parent=1 // pred_check_branch
      %83 = sbr.rel (0) target = $region33
    $region32: #{tpu_custom_call.1} parent=1 // pred_region
      %85 = dma.done [#allocation6], 256
    $region33: #{tpu_custom_call.1} parent=1 // pred_fallthru
      _
    // Predicated region
    $region34: #{tpu_custom_call.1} parent=1 // pred_check
      _
    $region35: #{tpu_custom_call.1} parent=1 // pred_check_branch
      %87 = sbr.rel (0) target = $region37
    $region36: #{tpu_custom_call.1} parent=1 // pred_region
      %89 = dma.done [#allocation6], 256
    $region37: #{tpu_custom_call.1} parent=1 // pred_fallthru
      _
    // Predicated region
    $region38: #{tpu_custom_call.1} parent=1 // pred_check
      _
    $region39: #{tpu_custom_call.1} parent=1 // pred_check_branch
      %91 = sbr.rel (0) target = $region41
    $region40: #{tpu_custom_call.1} parent=1 // pred_region
      %93 = dma.done [#allocation9], 128
    $region41: #{tpu_custom_call.1} parent=1 // pred_fallthru
      _
    // Predicated region
    $region42: #{tpu_custom_call.1} parent=1 // pred_check
      _
    $region43: #{tpu_custom_call.1} parent=1 // pred_check_branch
      %95 = sbr.rel (0) target = $region45
    $region44: #{tpu_custom_call.1} parent=1 // pred_region
      %97 = dma.done [#allocation9], 768
    $region45: #{tpu_custom_call.1} parent=1 // pred_fallthru
      _
    %v99 = vld [vmem:[#allocation8] sm:$0xff]
    %v100 = vld [vmem:[#allocation2] sm:$0xf]
    %v101 = vld [vmem:[#allocation5] sm:$0xf]
    %v102 = vld [vmem:[#allocation5 + $0x4] sm:$0xf]
    %v103 = vld [vmem:[#allocation5 + $0x8] sm:$0xf]
    %v104 = vld [vmem:[#allocation5 + $0xc] sm:$0xf]
    %v105 = vperm.slane %v99, 0
    %v110 = vunpack.c.l.b16 %v101
    %v111 = vunpack.c.l.b16 %v102
    %v112 = vunpack.c.l.b16 %v103
    %v113 = vunpack.c.l.b16 %v104
    %v114 = vpack.c.b16 %v111, %v110
    %v115 = vpack.c.b16 %v113, %v112
    %vm118 = vcmask 261120
    %v120 = vsel %vm118, %v100, 0
    %122 = vmatpush.bf16.msra.mxu0 0
    %123 = vmatpush.bf16.msra.mxu0 0
    %124 = vmatpush.bf16.msra.mxu0 0
    %125 = vmatpush.bf16.msra.mxu0 0
    %126 = vmatpush.bf16.msra.mxu0 0
    %127 = vmatpush.bf16.msra.mxu0 0
    %128 = vmatpush.bf16.msra.mxu0 %v115
    %129 = vmatpush.bf16.msra.mxu0 %v114
    %130 = vmatmul.bf16.gmra.mxu0 %v120
    %v131 = vpop.f32.mrf.mxu0
    %v132 = vadd.f32 %v105, %v131
    %v133 = vpop.f32.mrf.mxu0
    %134 = vdwg.mxu0
    %v135 = vsel %vm118, %v132, 0.0
    %v136 = vrot.slane %v135, 4
    %v137 = vadd.f32 %v135, %v136
    %v138 = vrot.slane %v137, 2
    %v139 = vadd.f32 %v137, %v138
    %v140 = vrot.slane %v139, 1
    %v141 = vadd.f32 %v139, %v140
    %v142 = vrcp.pop 8.0
    %v143 = vmul.f32 8.0, %v142
    %v144 = vsub.f32 1.0, %v143
    %v145 = vmul.f32 %v142, %v144
    %v146 = vadd.f32 %v142, %v145
    %vm147 = vweird.f32 %v142
    %v148 = vsel %vm147, %v142, %v146
    %v149 = vmul.f32 %v141, %v148
    %v150 = vsub.f32 %v132, %v149
    %v151 = vmul.f32 %v150, %v150
    %v152 = vsel %vm118, %v151, 0.0
    %v153 = vrot.slane %v152, 4
    %v154 = vadd.f32 %v152, %v153
    %v155 = vrot.slane %v154, 2
    %v156 = vadd.f32 %v154, %v155
    %v157 = vrot.slane %v156, 1
    %v158 = vadd.f32 %v156, %v157
    %v159 = vmul.f32 %v158, %v148
    %v160 = vadd.f32 %v159, 1e-05
    %v161 = vrsqrt.pop %v160
    %v162 = vmul.f32 %v161, %v160
    %v163 = vmul.f32 %v162, %v161
    %v164 = vmul.f32 0.5, %v163
    %v165 = vsub.f32 1.5, %v164
    %v166 = vmul.f32 %v161, %v165
    %vm167 = vweird.f32 %v160
    %vm168 = vweird.f32 %v161
    %vm169 = vmor %vm167, %vm168
    %v170 = vsel %vm169, %v161, %v166
    %v171 = vmul.f32 %v150, %v170
    %v172 = vperm.slane %v99, 1
    %v173 = vmul.f32 %v171, %v172
    %v174 = vperm.slane %v99, 2
    %v175 = vadd.f32 %v173, %v174
    %v176 = vmax.f32 %v175, 0.0
    %v177 = vpack.c.bf16 %v176, %v176
    %v178 = vld [vmem:[#allocation7] sm:$0xf]
    %v179 = vld [vmem:[#allocation7 + $0x4] sm:$0xf]
    %v180 = vld [vmem:[#allocation7 + $0x8] sm:$0xf]
    %v181 = vld [vmem:[#allocation7 + $0xc] sm:$0xf]
    %v182 = vperm.slane %v99, 3
    %v187 = vunpack.c.l.b16 %v178
    %v188 = vunpack.c.l.b16 %v179
    %v189 = vunpack.c.l.b16 %v180
    %v190 = vunpack.c.l.b16 %v181
    %v191 = vpack.c.b16 %v188, %v187
    %v192 = vpack.c.b16 %v190, %v189
    %v196 = vsel %vm118, %v177, 0
    %198 = vmatpush.bf16.msra.mxu0 0
    %199 = vmatpush.bf16.msra.mxu0 0
    %200 = vmatpush.bf16.msra.mxu0 0
    %201 = vmatpush.bf16.msra.mxu0 0
    %202 = vmatpush.bf16.msra.mxu0 0
    %203 = vmatpush.bf16.msra.mxu0 0
    %204 = vmatpush.bf16.msra.mxu0 %v192
    %205 = vmatpush.bf16.msra.mxu0 %v191
    %206 = vmatmul.bf16.gmra.mxu0 %v196
    %v207 = vpop.f32.mrf.mxu0
    %v208 = vadd.f32 %v182, %v207
    %v209 = vpop.f32.mrf.mxu0
    %210 = vdwg.mxu0
    %v211 = vsel %vm118, %v208, 0.0
    %v212 = vrot.slane %v211, 4
    %v213 = vadd.f32 %v211, %v212
    %v214 = vrot.slane %v213, 2
    %v215 = vadd.f32 %v213, %v214
    %v216 = vrot.slane %v215, 1
    %v217 = vadd.f32 %v215, %v216
    %v218 = vmul.f32 %v217, %v148
    %v219 = vsub.f32 %v208, %v218
    %v220 = vmul.f32 %v219, %v219
    %v221 = vsel %vm118, %v220, 0.0
    %v222 = vrot.slane %v221, 4
    %v223 = vadd.f32 %v221, %v222
    %v224 = vrot.slane %v223, 2
    %v225 = vadd.f32 %v223, %v224
    %v226 = vrot.slane %v225, 1
    %v227 = vadd.f32 %v225, %v226
    %v228 = vmul.f32 %v227, %v148
    %v229 = vadd.f32 %v228, 1e-05
    %v230 = vrsqrt.pop %v229
    %v231 = vmul.f32 %v230, %v229
    %v232 = vmul.f32 %v231, %v230
    %v233 = vmul.f32 0.5, %v232
    %v234 = vsub.f32 1.5, %v233
    %v235 = vmul.f32 %v230, %v234
    %vm236 = vweird.f32 %v229
    %vm237 = vweird.f32 %v230
    %vm238 = vmor %vm236, %vm237
    %v239 = vsel %vm238, %v230, %v235
    %v240 = vmul.f32 %v219, %v239
    %v241 = vperm.slane %v99, 4
    %v242 = vmul.f32 %v240, %v241
    %v243 = vperm.slane %v99, 5
    %v244 = vadd.f32 %v242, %v243
    %v245 = vmax.f32 %v244, 0.0
    %v246 = vpack.c.bf16 %v245, %v245
    %v247 = vld [vmem:[#allocation10] sm:$0xff]
    %v248 = vld [vmem:[#allocation10 + $0x8] sm:$0xf]
    %v249 = vld [vmem:[#allocation10 + $0xc] sm:$0xff]
    %v250 = vld [vmem:[#allocation10 + $0x14] sm:$0xf]
    %v251 = vld [vmem:[#allocation10 + $0x18] sm:$0xff]
    %v252 = vld [vmem:[#allocation10 + $0x20] sm:$0xf]
    %v253 = vld [vmem:[#allocation10 + $0x24] sm:$0xff]
    %v254 = vld [vmem:[#allocation10 + $0x2c] sm:$0xf]
    %v255 = vld [vmem:[%s5] sm:$0x7]
    %v257 = vperm.slane %v255, 0
    %v258 = vperm.slane %v255, 1
    %v259 = vperm.slane %v255, 2
    %v271 = vunpack.c.l.b16 %v247
    %v272 = vunpack.c.h.b16 %v247
    %v273 = vunpack.c.l.b16 %v248
    %v274 = vunpack.c.l.b16 %v249
    %v275 = vunpack.c.h.b16 %v249
    %v276 = vunpack.c.l.b16 %v250
    %v277 = vunpack.c.l.b16 %v251
    %v278 = vunpack.c.h.b16 %v251
    %v279 = vunpack.c.l.b16 %v252
    %v280 = vunpack.c.l.b16 %v253
    %v281 = vunpack.c.h.b16 %v253
    %v282 = vunpack.c.l.b16 %v254
    %v283 = vpack.c.b16 %v274, %v271
    %v284 = vpack.c.b16 %v275, %v272
    %v285 = vpack.c.b16 %v276, %v273
    %v286 = vpack.c.b16 %v280, %v277
    %v287 = vpack.c.b16 %v281, %v278
    %v288 = vpack.c.b16 %v282, %v279
    %v296 = vsel %vm118, %v246, 0
    %298 = vmatpush.bf16.msra.mxu0 0
    %299 = vmatpush.bf16.msra.mxu0 0
    %300 = vmatpush.bf16.msra.mxu0 0
    %301 = vmatpush.bf16.msra.mxu0 0
    %302 = vmatpush.bf16.msra.mxu0 0
    %303 = vmatpush.bf16.msra.mxu0 0
    %304 = vmatpush.bf16.msra.mxu0 %v286
    %305 = vmatpush.bf16.msra.mxu0 %v283
    %306 = vmatmul.bf16.gmra.mxu0 %v296
    %v307 = vpop.f32.mrf.mxu0
    %v308 = vadd.f32 %v257, %v307
    %v309 = vpop.f32.mrf.mxu0
    %310 = vdwg.mxu0
    %311 = vmatpush.bf16.msra.mxu0 0
    %312 = vmatpush.bf16.msra.mxu0 0
    %313 = vmatpush.bf16.msra.mxu0 0
    %314 = vmatpush.bf16.msra.mxu0 0
    %315 = vmatpush.bf16.msra.mxu0 0
    %316 = vmatpush.bf16.msra.mxu0 0
    %317 = vmatpush.bf16.msra.mxu0 %v287
    %318 = vmatpush.bf16.msra.mxu0 %v284
    %319 = vmatmul.bf16.gmra.mxu0 %v296
    %v320 = vpop.f32.mrf.mxu0
    %v321 = vadd.f32 %v258, %v320
    %v322 = vpop.f32.mrf.mxu0
    %323 = vdwg.mxu0
    %324 = vmatpush.bf16.msra.mxu0 0
    %325 = vmatpush.bf16.msra.mxu0 0
    %326 = vmatpush.bf16.msra.mxu0 0
    %327 = vmatpush.bf16.msra.mxu0 0
    %328 = vmatpush.bf16.msra.mxu0 0
    %329 = vmatpush.bf16.msra.mxu0 0
    %330 = vmatpush.bf16.msra.mxu0 %v288
    %331 = vmatpush.bf16.msra.mxu0 %v285
    %332 = vmatmul.bf16.gmra.mxu0 %v296
    %v333 = vpop.f32.mrf.mxu0
    %v334 = vadd.f32 %v259, %v333
    %v335 = vpop.f32.mrf.mxu0
    %336 = vdwg.mxu0
    %337 = vst [vmem:[#allocation11] sm:$0xff] %v308
    %338 = vst [vmem:[#allocation11 + $0x8] sm:$0xff] %v321
    %339 = vst [vmem:[#allocation11 + $0x10] sm:$0xff] %v334
    // Predicated region
    $region46: #{tpu_custom_call.1} parent=1 // pred_check
      _
    $region47: #{tpu_custom_call.1} parent=1 // pred_check_branch
      %341 = sbr.rel (0) target = $region49
    $region48: #{tpu_custom_call.1} parent=1 // pred_region
      %343 = vsyncadd [#allocation4], 0
      %s345 = sshll.u32 [#allocation11], 4
      %s346 = int_to_ptr.vmem [resolvable:$true] %s345
      %s347 = sshll.u32 %s6, 4
      %s348 = int_to_ptr.hbm [resolvable:$true] %s347
      %350 = dma.vmem_to_hbm [thread:$0]  %s346, 384, %s348, [#allocation4]
    $region49: #{tpu_custom_call.1} parent=1 // pred_fallthru
      _
    // Predicated region
    $region50: #{tpu_custom_call.1} parent=1 // pred_check
      _
    $region51: #{tpu_custom_call.1} parent=1 // pred_check_branch
      %352 = sbr.rel (0) target = $region53
    $region52: #{tpu_custom_call.1} parent=1 // pred_region
      %354 = dma.done [#allocation4], 384
    $region53: #{tpu_custom_call.1} parent=1 // pred_fallthru
      _
    %355 = vsyncpa [#allocation3], 1
    %356 = vsyncpa [#allocation6], 1
    %357 = vsyncpa [#allocation9], 1
    %358 = vsyncpa [#allocation4], 1

</llo_original>
